<compile_context>
chip_gen: v7x
topology: tpu7x:2x2x1
jax: 0.10.0
libtpu: 0.0.40
codegen_flags: <defaults>
</compile_context>

<pallas_src>
import jax
import jax.numpy as jnp
from jax.experimental import pallas as pl
from jax.experimental.pallas import tpu as pltpu

HIDDEN = 64
OUTPUT_DIM = 32            # config.model.output_dim
DEFAULT_TILE_B = 4096      # ~8 MiB double-buffered (lane-padded) -> fits all gens


def _round_up(n, m):
    return (n + m - 1) // m * m


def _numeric_encoder_kernel(x_ref, w1_ref, b1_ref, w2_ref, b2_ref, o_ref):
    # x: (TILE_B, 2), w1: (2, 64), b1: (1, 64), w2: (64, D), b2: (1, D), o: (TILE_B, D)
    x = x_ref[...]
    w1 = w1_ref[...]
    # Layer 1 (K=2): two VPU FMAs -- a K=2 MXU matmul would waste the systolic array.
    h = x[:, 0:1] * w1[0:1, :] + x[:, 1:2] * w1[1:2, :] + b1_ref[...]
    h = jnp.maximum(h, 0.0)                       # ReLU on VPU
    # Layer 2: 64 x D matmul on the MXU with f32 accumulation.
    y = jnp.dot(h, w2_ref[...], preferred_element_type=jnp.float32) + b2_ref[...]
    o_ref[...] = jnp.maximum(y, 0.0)              # final ReLU


def numeric_encoder(x, w1, b1, w2, b2, *, tile_b=DEFAULT_TILE_B):
    """x: (B, 2) or (2,) float32. w1: (64, 2), b1: (64,), w2: (D, 64), b2: (D,)."""
    if x.ndim == 1:                  # mirrors unsqueeze(0) in the PyTorch forward
        x = x[None, :]
    B = x.shape[0]
    D = w2.shape[0]

    # Choose a batch tile that is a multiple of 8 (sublane) and no larger than needed.
    tile_b = min(tile_b, _round_up(B, 8))
    tile_b = _round_up(tile_b, 8)
    b_padded = _round_up(B, tile_b)
    if b_padded != B:
        x = jnp.pad(x, ((0, b_padded - B), (0, 0)))   # zero rows; sliced off below

    # PyTorch Linear computes x @ W.T + b; pre-transpose weights for the kernel.
    w1_t = w1.T                       # (2, 64)
    w2_t = w2.T                       # (64, D)
    b1_2d = b1[None, :]               # (1, 64)
    b2_2d = b2[None, :]               # (1, D)

    grid = (b_padded // tile_b,)
    out = pl.pallas_call(
        _numeric_encoder_kernel,
        out_shape=jax.ShapeDtypeStruct((b_padded, D), jnp.float32),
        grid=grid,
        in_specs=[
            pl.BlockSpec((tile_b, 2), lambda i: (i, 0)),      # batch-tiled input
            pl.BlockSpec((2, HIDDEN), lambda i: (0, 0)),      # weights stay resident
            pl.BlockSpec((1, HIDDEN), lambda i: (0, 0)),
            pl.BlockSpec((HIDDEN, D), lambda i: (0, 0)),
            pl.BlockSpec((1, D), lambda i: (0, 0)),
        ],
        out_specs=pl.BlockSpec((tile_b, D), lambda i: (i, 0)),
        compiler_params=pltpu.CompilerParams(
            dimension_semantics=("parallel",)),               # megacore on v7x
    )(x, w1_t, b1_2d, w2_t, b2_2d)

    return out[:B] if b_padded != B else out


def _init_params(key):
    # Deterministic synthetic init mimicking nn.Linear param shapes.
    k1, k2, k3, k4 = jax.random.split(key, 4)
    w1 = jax.random.normal(k1, (HIDDEN, 2), jnp.float32) * 0.5        # (out, in)
    b1 = jax.random.normal(k2, (HIDDEN,), jnp.float32) * 0.1
    w2 = jax.random.normal(k3, (OUTPUT_DIM, HIDDEN), jnp.float32) * 0.1
    b2 = jax.random.normal(k4, (OUTPUT_DIM,), jnp.float32) * 0.1
    return w1, b1, w2, b2


if __name__ == "__main__":
    key = jax.random.PRNGKey(0)
    kx_small, kx_big, kp = jax.random.split(key, 3)

    w1, b1, w2, b2 = _init_params(kp)

    def ref_fwd(x):
        if x.ndim == 1:
            x = x[None, :]
        h = jnp.maximum(x @ w1.T + b1, 0.0)
        return jnp.maximum(h @ w2.T + b2, 0.0)

    # Small batch (mirrors typical per-call use of this module).
    B = 8
    x_small = jax.random.normal(kx_small, (B, 2), jnp.float32)
    out_small = jax.block_until_ready(numeric_encoder(x_small, w1, b1, w2, b2))
    assert out_small.shape == (B, OUTPUT_DIM)
    assert jnp.allclose(out_small, ref_fwd(x_small), atol=1e-5, rtol=1e-5)

    # Larger batch with a ragged tail: exercises batch tiling + pad/slice path.
    x_big = jax.random.normal(kx_big, (600, 2), jnp.float32)
    out_big = jax.block_until_ready(
        numeric_encoder(x_big, w1, b1, w2, b2, tile_b=256))   # grid=(3,), padded to 768
    assert out_big.shape == (600, OUTPUT_DIM)
    assert jnp.allclose(out_big, ref_fwd(x_big), atol=1e-5, rtol=1e-5)

    print("KERNEL_OK")
</pallas_src>

<mosaic_0001>
module attributes {stable_mosaic.version = 11 : i64} {
  func.func @_numeric_encoder_kernel(%arg0: i32, %arg1: memref<8x2xf32, #tpu.memory_space<vmem>>, %arg2: memref<2x64xf32, #tpu.memory_space<vmem>>, %arg3: memref<1x64xf32, #tpu.memory_space<vmem>>, %arg4: memref<64x32xf32, #tpu.memory_space<vmem>>, %arg5: memref<1x32xf32, #tpu.memory_space<vmem>>, %arg6: memref<8x32xf32, #tpu.memory_space<vmem>>) attributes {dimension_semantics = [#tpu.dimension_semantics<parallel>], iteration_bounds = array<i64: 1>, scalar_prefetch = 0 : i64, scratch_operands = 0 : i64, tpu.core_type = #tpu.core_type<tc>, window_params = [{transform_indices = @transform_0, window_bounds = array<i64: 8, 2>}, {pipeline_mode = #tpu.pipeline_mode<synchronous>, transform_indices = @transform_1, window_bounds = array<i64: 2, 64>}, {pipeline_mode = #tpu.pipeline_mode<synchronous>, transform_indices = @transform_2, window_bounds = array<i64: 1, 64>}, {pipeline_mode = #tpu.pipeline_mode<synchronous>, transform_indices = @transform_3, window_bounds = array<i64: 64, 32>}, {pipeline_mode = #tpu.pipeline_mode<synchronous>, transform_indices = @transform_4, window_bounds = array<i64: 1, 32>}, {transform_indices = @transform_5, window_bounds = array<i64: 8, 32>}]} {
    %c0 = arith.constant 0 : index
    %c0_0 = arith.constant 0 : index
    %0 = vector.load %arg1[%c0, %c0_0] : memref<8x2xf32, #tpu.memory_space<vmem>>, vector<8x2xf32>
    %c0_1 = arith.constant 0 : index
    %c0_2 = arith.constant 0 : index
    %1 = vector.load %arg2[%c0_1, %c0_2] : memref<2x64xf32, #tpu.memory_space<vmem>>, vector<2x64xf32>
    %2 = vector.extract_strided_slice %0 {offsets = [0, 0], sizes = [8, 1], strides = [1, 1]} : vector<8x2xf32> to vector<8x1xf32>
    %3 = vector.extract_strided_slice %1 {offsets = [0, 0], sizes = [1, 64], strides = [1, 1]} : vector<2x64xf32> to vector<1x64xf32>
    %4 = vector.broadcast %2 : vector<8x1xf32> to vector<8x64xf32>
    %5 = vector.broadcast %3 : vector<1x64xf32> to vector<8x64xf32>
    %6 = arith.mulf %4, %5 : vector<8x64xf32>
    %7 = vector.extract_strided_slice %0 {offsets = [0, 1], sizes = [8, 1], strides = [1, 1]} : vector<8x2xf32> to vector<8x1xf32>
    %8 = vector.extract_strided_slice %1 {offsets = [1, 0], sizes = [1, 64], strides = [1, 1]} : vector<2x64xf32> to vector<1x64xf32>
    %9 = vector.broadcast %7 : vector<8x1xf32> to vector<8x64xf32>
    %10 = vector.broadcast %8 : vector<1x64xf32> to vector<8x64xf32>
    %11 = arith.mulf %9, %10 : vector<8x64xf32>
    %12 = arith.addf %6, %11 : vector<8x64xf32>
    %c0_3 = arith.constant 0 : index
    %c0_4 = arith.constant 0 : index
    %13 = vector.load %arg3[%c0_3, %c0_4] : memref<1x64xf32, #tpu.memory_space<vmem>>, vector<1x64xf32>
    %14 = vector.broadcast %13 : vector<1x64xf32> to vector<8x64xf32>
    %15 = arith.addf %12, %14 : vector<8x64xf32>
    %cst = arith.constant 0.000000e+00 : f32
    %16 = vector.broadcast %cst : f32 to vector<8x64xf32>
    %17 = arith.maximumf %15, %16 : vector<8x64xf32>
    %c0_5 = arith.constant 0 : index
    %c0_6 = arith.constant 0 : index
    %18 = vector.load %arg4[%c0_5, %c0_6] : memref<64x32xf32, #tpu.memory_space<vmem>>, vector<64x32xf32>
    %cst_7 = arith.constant dense<0.000000e+00> : vector<8x32xf32>
    %19 = tpu.matmul %17, %18, %cst_7 {dimension_numbers = #tpu.dot_dimension_numbers<[1], [0], [0], [1], [0, 0, 1, 1], [], []>} : vector<8x64xf32>, vector<64x32xf32>, vector<8x32xf32> -> vector<8x32xf32>
    %c0_8 = arith.constant 0 : index
    %c0_9 = arith.constant 0 : index
    %20 = vector.load %arg5[%c0_8, %c0_9] : memref<1x32xf32, #tpu.memory_space<vmem>>, vector<1x32xf32>
    %21 = vector.broadcast %20 : vector<1x32xf32> to vector<8x32xf32>
    %22 = arith.addf %19, %21 : vector<8x32xf32>
    %cst_10 = arith.constant 0.000000e+00 : f32
    %23 = vector.broadcast %cst_10 : f32 to vector<8x32xf32>
    %24 = arith.maximumf %22, %23 : vector<8x32xf32>
    %c0_11 = arith.constant 0 : index
    %c0_12 = arith.constant 0 : index
    %25 = vector.load %arg6[%c0_11, %c0_12] : memref<8x32xf32, #tpu.memory_space<vmem>>, vector<8x32xf32>
    tpu.vector_store %arg6[%c0_11, %c0_12], %24 {strides = array<i32>} : memref<8x32xf32, #tpu.memory_space<vmem>>, vector<8x32xf32>,
    return
  }
  func.func @transform_0(%arg0: i32) -> (i32, i32) {
    %c0_i32 = arith.constant 0 : i32
    %c0_i32_0 = arith.constant 0 : i32
    return %arg0, %c0_i32 : i32, i32
  }
  func.func @transform_1(%arg0: i32) -> (i32, i32) {
    %c0_i32 = arith.constant 0 : i32
    %c0_i32_0 = arith.constant 0 : i32
    %c0_i32_1 = arith.constant 0 : i32
    return %c0_i32, %c0_i32_0 : i32, i32
  }
  func.func @transform_2(%arg0: i32) -> (i32, i32) {
    %c0_i32 = arith.constant 0 : i32
    %c0_i32_0 = arith.constant 0 : i32
    %c0_i32_1 = arith.constant 0 : i32
    return %c0_i32, %c0_i32_0 : i32, i32
  }
  func.func @transform_3(%arg0: i32) -> (i32, i32) {
    %c0_i32 = arith.constant 0 : i32
    %c0_i32_0 = arith.constant 0 : i32
    %c0_i32_1 = arith.constant 0 : i32
    return %c0_i32, %c0_i32_0 : i32, i32
  }
  func.func @transform_4(%arg0: i32) -> (i32, i32) {
    %c0_i32 = arith.constant 0 : i32
    %c0_i32_0 = arith.constant 0 : i32
    %c0_i32_1 = arith.constant 0 : i32
    return %c0_i32, %c0_i32_0 : i32, i32
  }
  func.func @transform_5(%arg0: i32) -> (i32, i32) {
    %c0_i32 = arith.constant 0 : i32
    %c0_i32_0 = arith.constant 0 : i32
    return %arg0, %c0_i32 : i32, i32
  }
}

</mosaic_0001>

<llo_original>
// kernel: tpu_custom_call.1
$region0: #{tpu_custom_call.1}
  #allocation0 [shape = 'u32[]', space=smem, size = 0x4, offset = 0x4, fixed_abs, tag = 'smem constant byte address 0x4 - core index']
  #allocation1 [shape = 'u32[144,128]{1,0:T(1,128)}', space=vmem, size = 0x12000, scoped, tag = 'internal scratch']
  %s0 = inlined_call_operand.vmem [shape: f32[8,2], index: 0, kind: input, shape index: {}]
  %s1 = inlined_call_operand.vmem [shape: f32[2,64], index: 1, kind: input, shape index: {}]
  %s2 = inlined_call_operand.vmem [shape: f32[1,64], index: 2, kind: input, shape index: {}]
  %s3 = inlined_call_operand.vmem [shape: f32[64,32], index: 3, kind: input, shape index: {}]
  %s4 = inlined_call_operand.vmem [shape: f32[1,32], index: 4, kind: input, shape index: {}]
  %s5 = inlined_call_operand.hbm [shape: f32[8,32], index: 5, kind: output, shape index: {}]
  %s6 = sld [smem:[#allocation0]]
  $region30: #{tpu_custom_call.1} parent=0
    _
  %s8 = ssub.s32 1, %s6
  %s9 = scalar_select 0, %s8, %s6
  $region1: #{tpu_custom_call.1} parent=0
    #allocation2 [shape = 'u8[4096]{0}', space=vmem, size = 0x1000, scoped, tag = 'output window, operand 0, single buffered']
    #allocation3 [shape = 's32[1]{0}', space=sflag, size = 0x4, scoped, tag = 'scoped memory for tpu_custom_call.1']
    %10 = vsyncpa [#allocation3], 0
    // Predicated region
    $region2: #{tpu_custom_call.1} parent=1 // pred_check
      _
    $region3: #{tpu_custom_call.1} parent=1 // pred_check_branch
      %12 = sbr.rel (0) target = $region5
    $region4: #{tpu_custom_call.1} parent=1 // pred_region
      _
    $region5: #{tpu_custom_call.1} parent=1 // pred_fallthru
      _
    // Predicated region
    $region6: #{tpu_custom_call.1} parent=1 // pred_check
      _
    $region7: #{tpu_custom_call.1} parent=1 // pred_check_branch
      %14 = sbr.rel (0) target = $region9
    $region8: #{tpu_custom_call.1} parent=1 // pred_region
      _
    $region9: #{tpu_custom_call.1} parent=1 // pred_fallthru
      _
    // Predicated region
    $region10: #{tpu_custom_call.1} parent=1 // pred_check
      _
    $region11: #{tpu_custom_call.1} parent=1 // pred_check_branch
      %16 = sbr.rel (0) target = $region13
    $region12: #{tpu_custom_call.1} parent=1 // pred_region
      _
    $region13: #{tpu_custom_call.1} parent=1 // pred_fallthru
      _
    // Predicated region
    $region14: #{tpu_custom_call.1} parent=1 // pred_check
      _
    $region15: #{tpu_custom_call.1} parent=1 // pred_check_branch
      %18 = sbr.rel (0) target = $region17
    $region16: #{tpu_custom_call.1} parent=1 // pred_region
      _
    $region17: #{tpu_custom_call.1} parent=1 // pred_fallthru
      _
    // Predicated region
    $region18: #{tpu_custom_call.1} parent=1 // pred_check
      _
    $region19: #{tpu_custom_call.1} parent=1 // pred_check_branch
      %20 = sbr.rel (0) target = $region21
    $region20: #{tpu_custom_call.1} parent=1 // pred_region
      _
    $region21: #{tpu_custom_call.1} parent=1 // pred_fallthru
      _
    %v21 = vld [vmem:[%s0] sm:$0xff]
    %v22 = vld [vmem:[%s1] sm:$0x3]
    %24 = vset.pattern.permute.xlu0 0
    %25 = vperm.xlu0 %24, %v21
    %v26 = vpop.permute.xlu0 %25
    %v28 = vlaneseq
    %v29 = vshrl.u32 %v28, 7
    %v30 = vsub.s32 0, %v29
    %v31 = vrot.slane %v22, %v30
    %v32 = vmul.f32 %v26, %v31
    %33 = vset.pattern.permute.xlu0 1
    %34 = vperm.xlu0 %33, %v21
    %v35 = vpop.permute.xlu0 %34
    %v37 = vlaneseq
    %v38 = vshrl.u32 %v37, 7
    %v39 = vsub.s32 1, %v38
    %v40 = vrot.slane %v22, %v39
    %v41 = vmul.f32 %v35, %v40
    %v42 = vadd.f32 %v32, %v41
    %v43 = vld [vmem:[%s2] sm:$0x1]
    %v45 = vlaneseq
    %v46 = vshrl.u32 %v45, 7
    %v47 = vsub.s32 0, %v46
    %v48 = vrot.slane %v43, %v47
    %v50 = vadd.f32 %v42, %v48
    %v51 = vmax.f32 %v50, 0.0
    %v52 = vld [vmem:[%s3] sm:$0xff]
    %v53 = vld [vmem:[%s3 + $0x8] sm:$0xff]
    %v54 = vld [vmem:[%s3 + $0x10] sm:$0xff]
    %v55 = vld [vmem:[%s3 + $0x18] sm:$0xff]
    %v56 = vld [vmem:[%s3 + $0x20] sm:$0xff]
    %v57 = vld [vmem:[%s3 + $0x28] sm:$0xff]
    %v58 = vld [vmem:[%s3 + $0x30] sm:$0xff]
    %v59 = vld [vmem:[%s3 + $0x38] sm:$0xff]
    %v60 = vld [vmem:[%s4] sm:$0x1]
    %v62 = vlaneseq
    %v63 = vshrl.u32 %v62, 7
    %v64 = vsub.s32 0, %v63
    %v65 = vrot.slane %v60, %v64
    %vm67 = vcmask 523264
    %v69 = vsel %vm67, %v51, 0
    %71 = vmatprep.subr.mxu0 0.0
    %72 = vmatpush1.msra.mxu0 %v52
    %73 = vmatprep.subr.mxu0 0.0
    %74 = vmatpush1.msra.mxu0 %v53
    %75 = vmatprep.subr.mxu0 0.0
    %76 = vmatpush1.msra.mxu0 %v54
    %77 = vmatprep.subr.mxu0 0.0
    %78 = vmatpush1.msra.mxu0 %v55
    %79 = vmatprep.subr.mxu0 0.0
    %80 = vmatpush1.msra.mxu0 %v56
    %81 = vmatprep.subr.mxu0 0.0
    %82 = vmatpush1.msra.mxu0 %v57
    %83 = vmatprep.subr.mxu0 0.0
    %84 = vmatpush1.msra.mxu0 %v58
    %85 = vmatprep.subr.mxu0 0.0
    %86 = vmatpush1.msra.mxu0 %v59
    %87 = vmatprep.subr.mxu0 0.0
    %88 = vmatpush1.msra.mxu0 0.0
    %89 = vmatprep.subr.mxu0 0.0
    %90 = vmatpush1.msra.mxu0 0.0
    %91 = vmatprep.subr.mxu0 0.0
    %92 = vmatpush1.msra.mxu0 0.0
    %93 = vmatprep.subr.mxu0 0.0
    %94 = vmatpush1.msra.mxu0 0.0
    %95 = vmatprep.subr.mxu0 0.0
    %96 = vmatpush1.msra.mxu0 0.0
    %97 = vmatprep.subr.mxu0 0.0
    %98 = vmatpush1.msra.mxu0 0.0
    %99 = vmatprep.subr.mxu0 0.0
    %100 = vmatpush1.msra.mxu0 0.0
    %101 = vmatprep.subr.mxu0 0.0
    %102 = vmatpush1.msra.mxu0 0.0
    %103 = vmatprep.subr.mxu0 0.0
    %104 = vmatpush1.msra.mxu0 0.0
    %105 = vmatprep.subr.mxu0 0.0
    %106 = vmatpush1.msra.mxu0 0.0
    %107 = vmatprep.subr.mxu0 0.0
    %108 = vmatpush1.msra.mxu0 0.0
    %109 = vmatprep.subr.mxu0 0.0
    %110 = vmatpush1.msra.mxu0 0.0
    %111 = vmatprep.subr.mxu0 0.0
    %112 = vmatpush1.msra.mxu0 0.0
    %113 = vmatprep.subr.mxu0 0.0
    %114 = vmatpush1.msra.mxu0 0.0
    %115 = vmatprep.subr.mxu0 0.0
    %116 = vmatpush1.msra.mxu0 0.0
    %117 = vmatprep.subr.mxu0 0.0
    %118 = vmatpush1.msra.mxu0 0.0
    %119 = vmatprep.subr.mxu0 0.0
    %120 = vmatpush1.msra.mxu0 0.0
    %121 = vmatprep.subr.mxu0 0.0
    %122 = vmatpush1.msra.mxu0 0.0
    %123 = vmatprep.subr.mxu0 0.0
    %124 = vmatpush1.msra.mxu0 0.0
    %125 = vmatprep.subr.mxu0 0.0
    %126 = vmatpush1.msra.mxu0 0.0
    %127 = vmatprep.subr.mxu0 0.0
    %128 = vmatpush1.msra.mxu0 0.0
    %129 = vmatprep.subr.mxu0 0.0
    %130 = vmatpush1.msra.mxu0 0.0
    %131 = vmatprep.subr.mxu0 0.0
    %132 = vmatpush1.msra.mxu0 0.0
    %133 = vmatprep.subr.mxu0 0.0
    %134 = vmatpush1.msra.mxu0 0.0
    %135 = vmatprep.mubr.f32.mxu0 0.0
    %136 = vmatmul.mubr.f32.gmra.mrb[0].mxu0 %v69
    %v137 = vpop.f32.mrb[0].mxu0
    %v138 = vadd.f32 %v65, %v137
    %v139 = vpop.f32.mrb[0].mxu0
    %140 = vdwg.mxu0
    %v141 = vmax.f32 %v138, 0.0
    %vm142 = vcmask 261120
    %143 = vst.msk [vmem:[#allocation2] sm:$0xff] %vm142, %v141
    // Predicated region
    $region22: #{tpu_custom_call.1} parent=1 // pred_check
      _
    $region23: #{tpu_custom_call.1} parent=1 // pred_check_branch
      %145 = sbr.rel (0) target = $region25
    $region24: #{tpu_custom_call.1} parent=1 // pred_region
      %s147 = ssub.s32 128, 128
      %148 = vsyncadd [#allocation3], %s147
      %s150 = sshll.u32 [#allocation2], 4
      %s151 = int_to_ptr.vmem [resolvable:$true] %s150
      %153 = dma.vmem_to_hbm [thread:$0]  %s151, 128, %s5, [#allocation3]
    $region25: #{tpu_custom_call.1} parent=1 // pred_fallthru
      _
    // Predicated region
    $region26: #{tpu_custom_call.1} parent=1 // pred_check
      _
    $region27: #{tpu_custom_call.1} parent=1 // pred_check_branch
      %155 = sbr.rel (0) target = $region29
    $region28: #{tpu_custom_call.1} parent=1 // pred_region
      %156 = dma.done [#allocation3], 128
    $region29: #{tpu_custom_call.1} parent=1 // pred_fallthru
      _
    %157 = vsyncpa [#allocation3], 1

</llo_original>
